<compile_context>
chip_gen: v7x
topology: tpu7x:2x2x1
jax: 0.10.0
libtpu: 0.0.40
codegen_flags: <defaults>
</compile_context>

<pallas_src>
import functools

import jax
import jax.numpy as jnp
import numpy as np
from jax import lax
from jax.experimental import pallas as pl
from jax.experimental.pallas import tpu as pltpu

LANES = 128  # lane-dense slab width; requires max(S, I, 4*H) <= LANES


def _slab_rows(B):
    return max(8, ((3 * B + 7) // 8) * 8)


# ----------------------------------------------------------------------------
# In-kernel helpers
# ----------------------------------------------------------------------------
def _load_consts(w_mxu_ref, w_vec_ref, H):
    """Split the two packed parameter slabs with static slices."""
    w_all = w_mxu_ref[...]                       # (3H, LANES) bf16
    W_h = w_all[0:H, 0:4 * H]                    # [w_hid | Wh_r | Wh_z | Wh_n]
    W_c = w_all[H:2 * H, 0:3 * H]                # [Wc_r | Wc_z | Wc_n]
    W_e = w_all[2 * H:3 * H, 0:H]                # fc_encoder weight (transposed)
    wv = w_vec_ref[...]                          # (8, LANES) f32
    attn_w = wv[0:1, 0:H]
    w_fin = wv[1:2, 0:H]
    xw = wv[2:3, 0:3 * H]                        # folded x-repeat columns
    bias_c = wv[3:4, 0:3 * H]                    # [b_r(sum) | b_z(sum) | b_in]
    b_hn = wv[4:5, 0:H]
    b_fin = wv[5:6, 0:1]
    return W_h, W_c, W_e, attn_w, w_fin, xw, bias_c, b_hn, b_fin


def _make_slab_builder(B, S, H, I, rows):
    """Lane-dense (rows, LANES) output slab builder; zero pads hoisted (built
    once per kernel trace, loop-invariant for the fori_loop body)."""
    zh = jnp.zeros((B, LANES - H), jnp.float32)
    zs = jnp.zeros((B, LANES - S), jnp.float32)
    zo = jnp.zeros((B, LANES - I), jnp.float32)
    zf = jnp.zeros((rows - 3 * B, LANES), jnp.float32) if rows > 3 * B else None

    def build(out, h_new, attn):
        parts = [jnp.concatenate([h_new, zh], axis=-1),   # rows 0:B   -> hidden
                 jnp.concatenate([attn, zs], axis=-1),    # rows B:2B  -> attention
                 jnp.concatenate([out, zo], axis=-1)]     # rows 2B:3B -> output
        if zf is not None:
            parts.append(zf)
        return jnp.concatenate(parts, axis=0)             # (rows, LANES), one store

    return build


def _decode_step(x, h, enc, fc_e, W_h, W_c, attn_w, w_fin, xw, bias_c, b_hn,
                 b_fin, H):
    """One Bahdanau-attention + GRU decode step.
    x:(B,1) f32  h:(B,H) f32  enc:(B,S,H) f32  fc_e:(B,S,H) f32 (= enc @ w_enc)
    Returns (out (B,1), h_new (B,H), attn (B,S))."""
    # Fused hidden-side matmul: [fc_h | gh_r | gh_z | gh_n] in one MXU pass.
    gh = jnp.dot(h.astype(jnp.bfloat16), W_h,
                 preferred_element_type=jnp.float32)                      # (B,4H)

    # --- Bahdanau attention (fc_e is loop-invariant, passed in) ---------------
    tmp = jnp.tanh(gh[:, 0:H][:, None, :] + fc_e)                         # (B,S,H)
    scores = jnp.sum(tmp * attn_w[None], axis=-1)                         # (B,S)
    m = jnp.max(scores, axis=-1, keepdims=True)
    e = jnp.exp(scores - m)
    attn = e * pl.reciprocal(jnp.sum(e, axis=-1, keepdims=True), approx=True)
    ctx = jnp.sum(attn[:, :, None] * enc, axis=1)                         # (B,H)

    # --- GRU cell (PyTorch gate order r,z,n), one fused ctx-side matmul -------
    gc = (jnp.dot(ctx.astype(jnp.bfloat16), W_c,
                  preferred_element_type=jnp.float32)
          + x * xw + bias_c)                                              # (B,3H)
    r = jax.nn.sigmoid(gc[:, 0:H] + gh[:, H:2 * H])
    z = jax.nn.sigmoid(gc[:, H:2 * H] + gh[:, 2 * H:3 * H])
    n = jnp.tanh(gc[:, 2 * H:3 * H] + r * (gh[:, 3 * H:4 * H] + b_hn))
    h_new = (1.0 - z) * n + z * h                                         # (B,H)

    # --- fc_final (input_size == 1) + ReLU: VPU mul + lane reduce --------------
    out = jnp.maximum(
        jnp.sum(h_new * w_fin, axis=-1, keepdims=True) + b_fin, 0.0)      # (B,1)
    return out, h_new, attn


# ----------------------------------------------------------------------------
# Single-step kernel (exact module forward semantics)
# ----------------------------------------------------------------------------
def _single_step_kernel(x_ref, h0_ref, enc_ref, w_mxu_ref, w_vec_ref, slab_ref):
    B, S, H = enc_ref.shape
    I = x_ref.shape[1]
    rows = slab_ref.shape[0]
    (W_h, W_c, W_e, attn_w, w_fin, xw, bias_c, b_hn,
     b_fin) = _load_consts(w_mxu_ref, w_vec_ref, H)

    enc = enc_ref[...]
    fc_e = jnp.dot(enc.reshape(B * S, H).astype(jnp.bfloat16), W_e,
                   preferred_element_type=jnp.float32).reshape(B, S, H)

    out, h_new, attn = _decode_step(x_ref[...], h0_ref[...], enc, fc_e,
                                    W_h, W_c, attn_w, w_fin, xw, bias_c,
                                    b_hn, b_fin, H)
    build = _make_slab_builder(B, S, H, I, rows)
    slab_ref[...] = build(out, h_new, attn)   # one unmasked lane-dense store


@jax.jit
def decoder_forward(X, hidden_state, encoder_outputs, prepared):
    """BahdanauDecoderGRU.forward (num_layers=1, multivariate=False, no dropout).
    X:(B,1)  hidden_state:(1,B,H)  encoder_outputs:(B,S,H)
    -> (output (B,I), h_dec (1,B,H), attn_weights (B,1,S))."""
    B, I = X.shape
    _, S, H = encoder_outputs.shape
    assert S <= LANES and 4 * H <= LANES and I == 1
    rows = _slab_rows(B)

    vmem = pl.BlockSpec(memory_space=pltpu.MemorySpace.VMEM)
    slab = pl.pallas_call(
        _single_step_kernel,
        out_shape=jax.ShapeDtypeStruct((rows, LANES), jnp.float32),
        in_specs=[vmem] * 5,
        out_specs=vmem,
    )(X, hidden_state[0], encoder_outputs, prepared["w_mxu"], prepared["w_vec"])

    out = slab[2 * B:3 * B, :I]
    h_dec = slab[0:B, :H][None, :, :]
    attn = slab[B:2 * B, :S][:, None, :]
    return out, h_dec, attn


# ----------------------------------------------------------------------------
# Chunked autoregressive rollout: grid over chunks, fori_loop over steps inside,
# weights + encoder outputs + fc_e resident, (x, h) carried as loop values.
# ----------------------------------------------------------------------------
def _rollout_kernel(x0_ref, h0_ref, enc_ref, w_mxu_ref, w_vec_ref, o_ref,
                    h_scr, x_scr, fce_scr, *, steps_per_chunk, unroll):
    B, S, H = enc_ref.shape
    I = x0_ref.shape[1]
    rows = o_ref.shape[1]
    (W_h, W_c, W_e, attn_w, w_fin, xw, bias_c, b_hn,
     b_fin) = _load_consts(w_mxu_ref, w_vec_ref, H)
    enc = enc_ref[...]

    @pl.when(pl.program_id(0) == 0)
    def _():
        h_scr[...] = h0_ref[...]
        x_scr[...] = x0_ref[...]
        # loop-invariant encoder projection, computed exactly once
        fce_scr[...] = jnp.dot(
            enc.reshape(B * S, H).astype(jnp.bfloat16), W_e,
            preferred_element_type=jnp.float32).reshape(B, S, H)

    fc_e = fce_scr[...]
    build = _make_slab_builder(B, S, H, I, rows)   # zero pads hoisted out of loop

    def body(t, carry):
        x, h = carry
        out, h_new, attn = _decode_step(x, h, enc, fc_e, W_h, W_c, attn_w,
                                        w_fin, xw, bias_c, b_hn, b_fin, H)
        o_ref[t] = build(out, h_new, attn)         # one (rows,128) store / step
        return (out, h_new)                         # autoregressive: x_{t+1}=out_t

    x_fin, h_fin = lax.fori_loop(0, steps_per_chunk, body,
                                 (x_scr[...], h_scr[...]), unroll=unroll)
    x_scr[...] = x_fin                               # carry state to next chunk
    h_scr[...] = h_fin


@functools.partial(jax.jit,
                   static_argnames=("num_steps", "steps_per_chunk", "inner_unroll"))
def decoder_rollout(X, hidden_state, encoder_outputs, prepared, *, num_steps,
                    steps_per_chunk=64, inner_unroll=4):
    """Run `num_steps` autoregressive decode steps in ONE pallas_call.
    Returns (outs (T,B,I), h_last (1,B,H), attns (T,B,S))."""
    B, I = X.shape
    _, S, H = encoder_outputs.shape
    assert S <= LANES and 4 * H <= LANES and I == 1
    rows = _slab_rows(B)

    T = num_steps
    tc = min(steps_per_chunk, T)
    num_chunks = pl.cdiv(T, tc)
    T_pad = num_chunks * tc
    unroll = inner_unroll if (inner_unroll > 0 and tc % inner_unroll == 0) else 1

    resident2 = lambda c: (0, 0)
    resident3 = lambda c: (0, 0, 0)
    grid_spec = pltpu.PrefetchScalarGridSpec(
        num_scalar_prefetch=0,
        grid=(num_chunks,),
        in_specs=[
            pl.BlockSpec((B, I), resident2),                 # X0
            pl.BlockSpec((B, H), resident2),                 # h0
            pl.BlockSpec((B, S, H), resident3),              # encoder outputs
            pl.BlockSpec(prepared["w_mxu"].shape, resident2),  # bf16 matmul slab
            pl.BlockSpec(prepared["w_vec"].shape, resident2),  # f32 VPU constants
        ],
        out_specs=pl.BlockSpec((tc, rows, LANES), lambda c: (c, 0, 0)),
        scratch_shapes=[pltpu.VMEM((B, H), jnp.float32),     # hidden carry
                        pltpu.VMEM((B, I), jnp.float32),     # autoregressive x
                        pltpu.VMEM((B, S, H), jnp.float32)]) # resident fc_e

    kern = functools.partial(_rollout_kernel, steps_per_chunk=tc, unroll=unroll)
    slab = pl.pallas_call(
        kern,
        out_shape=jax.ShapeDtypeStruct((T_pad, rows, LANES), jnp.float32),
        grid_spec=grid_spec,
        compiler_params=pltpu.CompilerParams(
            dimension_semantics=("arbitrary",)),   # chunks are sequential (carry)
    )(X, hidden_state[0], encoder_outputs, prepared["w_mxu"], prepared["w_vec"])

    outs = slab[:T, 2 * B:3 * B, :I]               # (T, B, I)
    h_last = slab[T - 1, 0:B, :H][None]            # (1, B, H)
    attns = slab[:T, B:2 * B, :S]                  # (T, B, S)
    return outs, h_last, attns


# ----------------------------------------------------------------------------
# One-time parameter preparation (all transposes / splits / packing hoisted)
# ----------------------------------------------------------------------------
def prepare_params(params):
    w_ih, w_hh = params["w_ih"], params["w_hh"]
    H = w_hh.shape[1]
    I = params["w_final"].shape[0]
    assert I == 1, "input_size must be 1 (multivariate=False)"
    assert w_ih.shape[0] == 3 * H and w_hh.shape[0] == 3 * H
    assert 4 * H <= LANES and H % 16 == 0

    # hidden-side fused block: [fc_hidden | Wh_r | Wh_z | Wh_n]  -> (H, 4H)
    W_h = jnp.concatenate(
        [params["w_fc_hidden"].T, w_hh[0:H].T, w_hh[H:2 * H].T, w_hh[2 * H:3 * H].T],
        axis=1)
    # ctx-side fused block: [Wc_r | Wc_z | Wc_n]  -> (H, 3H)
    W_c = jnp.concatenate(
        [w_ih[0:H, :H].T, w_ih[H:2 * H, :H].T, w_ih[2 * H:3 * H, :H].T], axis=1)
    W_e = params["w_fc_encoder"].T                                   # (H, H)

    def padlanes(a):
        return jnp.concatenate(
            [a, jnp.zeros((a.shape[0], LANES - a.shape[1]), a.dtype)], axis=1)

    # bf16 MXU slab: rows 0:H = W_h, H:2H = W_c (padded), 2H:3H = W_e (padded)
    w_mxu = jnp.concatenate(
        [padlanes(W_h), padlanes(W_c), padlanes(W_e)], axis=0).astype(jnp.bfloat16)

    # x-repeat folding (valid for I == 1): x_rep @ W_x^T == x * W_x.sum(axis=1)
    xw = jnp.concatenate([w_ih[0:H, H:].sum(1), w_ih[H:2 * H, H:].sum(1),
                          w_ih[2 * H:3 * H, H:].sum(1)])             # (3H,)
    b_ih, b_hh = params["b_ih"], params["b_hh"]
    bias_c = jnp.concatenate([b_ih[0:H] + b_hh[0:H],
                              b_ih[H:2 * H] + b_hh[H:2 * H],
                              b_ih[2 * H:3 * H]])                    # (3H,)
    b_hn = b_hh[2 * H:3 * H]                                          # (H,)

    def row(v):
        v = v.reshape(-1).astype(jnp.float32)
        return jnp.concatenate([v, jnp.zeros((LANES - v.shape[0],), jnp.float32)])[None]

    # f32 VPU-constant slab (8, LANES)
    w_vec = jnp.concatenate([
        row(params["attn_weight"]),        # 0: attention weight
        row(params["w_final"]),            # 1: fc_final weight
        row(xw),                           # 2: folded x columns (3H)
        row(bias_c),                       # 3: gate biases (r+z pre-summed, b_in)
        row(b_hn),                         # 4: hidden-side n bias
        row(params["b_final"]),            # 5: fc_final bias (lane 0)
        jnp.zeros((2, LANES), jnp.float32),
    ], axis=0)

    return {"w_mxu": w_mxu, "w_vec": w_vec}


# ----------------------------------------------------------------------------
# Pure-JAX f32 reference (mirrors the PyTorch forward) for correctness checks
# ----------------------------------------------------------------------------
def reference_forward(params, X, hidden_state, encoder_outputs):
    H = params["w_hh"].shape[1]
    h0 = hidden_state[0]
    fc_h = h0 @ params["w_fc_hidden"].T
    fc_e = encoder_outputs @ params["w_fc_encoder"].T
    tmp = jnp.tanh(fc_h[:, None, :] + fc_e)
    scores = jnp.einsum("h,bsh->bs", params["attn_weight"][0], tmp)
    attn = jax.nn.softmax(scores, axis=-1)
    ctx = jnp.einsum("bs,bsh->bh", attn, encoder_outputs)
    R = params["w_ih"].shape[1] - H
    gin = jnp.concatenate([ctx, jnp.repeat(X, R, axis=1)], axis=1)
    gi = gin @ params["w_ih"].T + params["b_ih"]
    gh = h0 @ params["w_hh"].T + params["b_hh"]
    r = jax.nn.sigmoid(gi[:, :H] + gh[:, :H])
    z = jax.nn.sigmoid(gi[:, H:2 * H] + gh[:, H:2 * H])
    n = jnp.tanh(gi[:, 2 * H:] + r * gh[:, 2 * H:])
    h_new = (1.0 - z) * n + z * h0
    out = jax.nn.relu(h_new @ params["w_final"].T + params["b_final"])
    return out, h_new[None], attn[:, None, :]


# ----------------------------------------------------------------------------
# Deterministic parameter construction (shapes per module __init__)
# ----------------------------------------------------------------------------
def make_params(key, input_size, hidden_size, repeat):
    H, I, R = hidden_size, input_size, repeat
    ks = jax.random.split(key, 9)

    def uni(k, shape, fan_in):
        bound = 1.0 / jnp.sqrt(jnp.float32(fan_in))
        return jax.random.uniform(k, shape, jnp.float32, -bound, bound)

    return {
        "w_fc_hidden": uni(ks[0], (H, H), H),
        "w_fc_encoder": uni(ks[1], (H, H), H),
        "attn_weight": jax.random.normal(ks[2], (1, H), jnp.float32) * 0.1,
        "w_ih": uni(ks[3], (3 * H, H + I * R), H),
        "w_hh": uni(ks[4], (3 * H, H), H),
        "b_ih": uni(ks[5], (3 * H,), H),
        "b_hh": uni(ks[6], (3 * H,), H),
        "w_final": uni(ks[7], (I, H), H),
        "b_final": uni(ks[8], (I,), H),
    }


if __name__ == "__main__":
    # module config: input_size=1, hidden_size=32, num_layers=1,
    # multivariate=False, dropout=False, repeat=40
    B, S, H, I, R = 2, 8, 32, 1, 40

    key = jax.random.PRNGKey(0)
    k_x, k_h, k_e, k_p = jax.random.split(key, 4)

    X = jax.random.normal(k_x, (B, I), jnp.float32)                 # (B, 1)
    hidden_state = jax.random.normal(k_h, (1, B, H), jnp.float32)   # (1, B, H)
    encoder_outputs = jax.random.normal(k_e, (B, S, H), jnp.float32)

    params = make_params(k_p, I, H, R)
    prepared = prepare_params(params)   # one-time weight layout / packing work

    # ---- single decode step (module forward semantics) ----
    out, h_dec, attn_w = decoder_forward(X, hidden_state, encoder_outputs, prepared)
    jax.block_until_ready((out, h_dec, attn_w))
    assert out.shape == (B, I)
    assert h_dec.shape == (1, B, H)
    assert attn_w.shape == (B, 1, S)

    # correctness vs. pure-JAX f32 reference (bf16 MXU + approx recip tolerance)
    r_out, r_h, r_attn = reference_forward(params, X, hidden_state, encoder_outputs)
    assert np.allclose(np.asarray(out), np.asarray(r_out), atol=5e-2, rtol=5e-2)
    assert np.allclose(np.asarray(h_dec), np.asarray(r_h), atol=5e-2, rtol=5e-2)
    assert np.allclose(np.asarray(attn_w), np.asarray(r_attn), atol=5e-2, rtol=5e-2)

    # ---- chunked autoregressive rollout (in-kernel fori_loop over steps) ----
    T = 64
    outs, h_last, attns = decoder_rollout(
        X, hidden_state, encoder_outputs, prepared,
        num_steps=T, steps_per_chunk=16, inner_unroll=4)
    jax.block_until_ready((outs, h_last, attns))
    assert outs.shape == (T, B, I)
    assert h_last.shape == (1, B, H)
    assert attns.shape == (T, B, S)

    # step 0 of the rollout must reproduce the single-step forward
    assert np.allclose(np.asarray(outs[0]), np.asarray(out), atol=1e-3, rtol=1e-3)
    assert np.allclose(np.asarray(attns[0]), np.asarray(attn_w[:, 0, :]),
                       atol=1e-3, rtol=1e-3)

    print("KERNEL_OK")
</pallas_src>

<mosaic_0001>
module attributes {stable_mosaic.version = 11 : i64} {
  func.func @_single_step_kernel(%arg0: memref<2x1xf32, #tpu.memory_space<vmem>>, %arg1: memref<2x32xf32, #tpu.memory_space<vmem>>, %arg2: memref<2x8x32xf32, #tpu.memory_space<vmem>>, %arg3: memref<96x128xbf16, #tpu.memory_space<vmem>>, %arg4: memref<8x128xf32, #tpu.memory_space<vmem>>, %arg5: memref<8x128xf32, #tpu.memory_space<vmem>>) attributes {dimension_semantics = [], scalar_prefetch = 0 : i64, scratch_operands = 0 : i64, tpu.core_type = #tpu.core_type<tc>} {
    %c0 = arith.constant 0 : index
    %c0_0 = arith.constant 0 : index
    %0 = vector.load %arg3[%c0, %c0_0] : memref<96x128xbf16, #tpu.memory_space<vmem>>, vector<96x128xbf16>
    %1 = vector.extract_strided_slice %0 {offsets = [0, 0], sizes = [32, 128], strides = [1, 1]} : vector<96x128xbf16> to vector<32x128xbf16>
    %2 = vector.extract_strided_slice %0 {offsets = [32, 0], sizes = [32, 96], strides = [1, 1]} : vector<96x128xbf16> to vector<32x96xbf16>
    %3 = vector.extract_strided_slice %0 {offsets = [64, 0], sizes = [32, 32], strides = [1, 1]} : vector<96x128xbf16> to vector<32x32xbf16>
    %c0_1 = arith.constant 0 : index
    %c0_2 = arith.constant 0 : index
    %4 = vector.load %arg4[%c0_1, %c0_2] : memref<8x128xf32, #tpu.memory_space<vmem>>, vector<8x128xf32>
    %5 = vector.extract_strided_slice %4 {offsets = [0, 0], sizes = [1, 32], strides = [1, 1]} : vector<8x128xf32> to vector<1x32xf32>
    %6 = vector.extract_strided_slice %4 {offsets = [1, 0], sizes = [1, 32], strides = [1, 1]} : vector<8x128xf32> to vector<1x32xf32>
    %7 = vector.extract_strided_slice %4 {offsets = [2, 0], sizes = [1, 96], strides = [1, 1]} : vector<8x128xf32> to vector<1x96xf32>
    %8 = vector.extract_strided_slice %4 {offsets = [3, 0], sizes = [1, 96], strides = [1, 1]} : vector<8x128xf32> to vector<1x96xf32>
    %9 = vector.extract_strided_slice %4 {offsets = [4, 0], sizes = [1, 32], strides = [1, 1]} : vector<8x128xf32> to vector<1x32xf32>
    %10 = vector.extract_strided_slice %4 {offsets = [5, 0], sizes = [1, 1], strides = [1, 1]} : vector<8x128xf32> to vector<1x1xf32>
    %c0_3 = arith.constant 0 : index
    %c0_4 = arith.constant 0 : index
    %c0_5 = arith.constant 0 : index
    %11 = vector.load %arg2[%c0_3, %c0_4, %c0_5] : memref<2x8x32xf32, #tpu.memory_space<vmem>>, vector<2x8x32xf32>
    %12 = vector.shape_cast %11 : vector<2x8x32xf32> to vector<16x32xf32>
    %13 = arith.truncf %12 : vector<16x32xf32> to vector<16x32xbf16>
    %cst = arith.constant dense<0.000000e+00> : vector<16x32xf32>
    %14 = tpu.matmul %13, %3, %cst {dimension_numbers = #tpu.dot_dimension_numbers<[1], [0], [0], [1], [0, 0, 1, 1], [], []>} : vector<16x32xbf16>, vector<32x32xbf16>, vector<16x32xf32> -> vector<16x32xf32>
    %15 = vector.shape_cast %14 : vector<16x32xf32> to vector<2x8x32xf32>
    %c0_6 = arith.constant 0 : index
    %c0_7 = arith.constant 0 : index
    %16 = vector.load %arg0[%c0_6, %c0_7] : memref<2x1xf32, #tpu.memory_space<vmem>>, vector<2x1xf32>
    %c0_8 = arith.constant 0 : index
    %c0_9 = arith.constant 0 : index
    %17 = vector.load %arg1[%c0_8, %c0_9] : memref<2x32xf32, #tpu.memory_space<vmem>>, vector<2x32xf32>
    %18 = arith.truncf %17 : vector<2x32xf32> to vector<2x32xbf16>
    %cst_10 = arith.constant dense<0.000000e+00> : vector<2x128xf32>
    %19 = tpu.matmul %18, %1, %cst_10 {dimension_numbers = #tpu.dot_dimension_numbers<[1], [0], [0], [1], [0, 0, 1, 1], [], []>} : vector<2x32xbf16>, vector<32x128xbf16>, vector<2x128xf32> -> vector<2x128xf32>
    %20 = vector.extract_strided_slice %19 {offsets = [0, 0], sizes = [2, 32], strides = [1, 1]} : vector<2x128xf32> to vector<2x32xf32>
    %21 = vector.shape_cast %20 : vector<2x32xf32> to vector<2x1x32xf32>
    %22 = vector.broadcast %21 : vector<2x1x32xf32> to vector<2x8x32xf32>
    %23 = arith.addf %22, %15 : vector<2x8x32xf32>
    %24 = math.tanh %23 : vector<2x8x32xf32>
    %25 = vector.shape_cast %5 : vector<1x32xf32> to vector<1x1x32xf32>
    %26 = vector.broadcast %25 : vector<1x1x32xf32> to vector<2x8x32xf32>
    %27 = arith.mulf %24, %26 : vector<2x8x32xf32>
    %cst_11 = arith.constant dense<0.000000e+00> : vector<2x8xf32>
    %28 = vector.multi_reduction <add>, %27, %cst_11 [2] : vector<2x8x32xf32> to vector<2x8xf32>
    %cst_12 = arith.constant dense<0xFF800000> : vector<2xf32>
    %29 = vector.multi_reduction <maximumf>, %28, %cst_12 [1] : vector<2x8xf32> to vector<2xf32>
    %30 = vector.shape_cast %29 : vector<2xf32> to vector<2x1xf32>
    %31 = vector.broadcast %30 : vector<2x1xf32> to vector<2x8xf32>
    %32 = arith.subf %28, %31 : vector<2x8xf32>
    %33 = math.exp %32 : vector<2x8xf32>
    %cst_13 = arith.constant dense<0.000000e+00> : vector<2xf32>
    %34 = vector.multi_reduction <add>, %33, %cst_13 [1] : vector<2x8xf32> to vector<2xf32>
    %35 = vector.shape_cast %34 : vector<2xf32> to vector<2x1xf32>
    %36 = tpu.reciprocal %35 {approx = true} : vector<2x1xf32> -> vector<2x1xf32>
    %37 = vector.broadcast %36 : vector<2x1xf32> to vector<2x8xf32>
    %38 = arith.mulf %33, %37 : vector<2x8xf32>
    %39 = vector.shape_cast %38 : vector<2x8xf32> to vector<2x8x1xf32>
    %40 = vector.broadcast %39 : vector<2x8x1xf32> to vector<2x8x32xf32>
    %41 = arith.mulf %40, %11 : vector<2x8x32xf32>
    %cst_14 = arith.constant dense<0.000000e+00> : vector<2x32xf32>
    %42 = vector.multi_reduction <add>, %41, %cst_14 [1] : vector<2x8x32xf32> to vector<2x32xf32>
    %43 = arith.truncf %42 : vector<2x32xf32> to vector<2x32xbf16>
    %cst_15 = arith.constant dense<0.000000e+00> : vector<2x96xf32>
    %44 = tpu.matmul %43, %2, %cst_15 {dimension_numbers = #tpu.dot_dimension_numbers<[1], [0], [0], [1], [0, 0, 1, 1], [], []>} : vector<2x32xbf16>, vector<32x96xbf16>, vector<2x96xf32> -> vector<2x96xf32>
    %45 = vector.broadcast %16 : vector<2x1xf32> to vector<2x96xf32>
    %46 = vector.broadcast %7 : vector<1x96xf32> to vector<2x96xf32>
    %47 = arith.mulf %45, %46 : vector<2x96xf32>
    %48 = arith.addf %44, %47 : vector<2x96xf32>
    %49 = vector.broadcast %8 : vector<1x96xf32> to vector<2x96xf32>
    %50 = arith.addf %48, %49 : vector<2x96xf32>
    %51 = vector.extract_strided_slice %50 {offsets = [0, 0], sizes = [2, 32], strides = [1, 1]} : vector<2x96xf32> to vector<2x32xf32>
    %52 = vector.extract_strided_slice %19 {offsets = [0, 32], sizes = [2, 32], strides = [1, 1]} : vector<2x128xf32> to vector<2x32xf32>
    %53 = arith.addf %51, %52 : vector<2x32xf32>
    %54 = arith.negf %53 : vector<2x32xf32>
    %55 = math.exp %54 : vector<2x32xf32>
    %cst_16 = arith.constant 1.000000e+00 : f32
    %56 = vector.broadcast %cst_16 : f32 to vector<2x32xf32>
    %57 = arith.addf %56, %55 : vector<2x32xf32>
    %58 = arith.divf %56, %57 : vector<2x32xf32>
    %59 = vector.extract_strided_slice %50 {offsets = [0, 32], sizes = [2, 32], strides = [1, 1]} : vector<2x96xf32> to vector<2x32xf32>
    %60 = vector.extract_strided_slice %19 {offsets = [0, 64], sizes = [2, 32], strides = [1, 1]} : vector<2x128xf32> to vector<2x32xf32>
    %61 = arith.addf %59, %60 : vector<2x32xf32>
    %62 = arith.negf %61 : vector<2x32xf32>
    %63 = math.exp %62 : vector<2x32xf32>
    %cst_17 = arith.constant 1.000000e+00 : f32
    %64 = vector.broadcast %cst_17 : f32 to vector<2x32xf32>
    %65 = arith.addf %64, %63 : vector<2x32xf32>
    %66 = arith.divf %64, %65 : vector<2x32xf32>
    %67 = vector.extract_strided_slice %50 {offsets = [0, 64], sizes = [2, 32], strides = [1, 1]} : vector<2x96xf32> to vector<2x32xf32>
    %68 = vector.extract_strided_slice %19 {offsets = [0, 96], sizes = [2, 32], strides = [1, 1]} : vector<2x128xf32> to vector<2x32xf32>
    %69 = vector.broadcast %9 : vector<1x32xf32> to vector<2x32xf32>
    %70 = arith.addf %68, %69 : vector<2x32xf32>
    %71 = arith.mulf %58, %70 : vector<2x32xf32>
    %72 = arith.addf %67, %71 : vector<2x32xf32>
    %73 = math.tanh %72 : vector<2x32xf32>
    %cst_18 = arith.constant 1.000000e+00 : f32
    %74 = vector.broadcast %cst_18 : f32 to vector<2x32xf32>
    %75 = arith.subf %74, %66 : vector<2x32xf32>
    %76 = arith.mulf %75, %73 : vector<2x32xf32>
    %77 = arith.mulf %66, %17 : vector<2x32xf32>
    %78 = arith.addf %76, %77 : vector<2x32xf32>
    %79 = vector.broadcast %6 : vector<1x32xf32> to vector<2x32xf32>
    %80 = arith.mulf %78, %79 : vector<2x32xf32>
    %cst_19 = arith.constant dense<0.000000e+00> : vector<2xf32>
    %81 = vector.multi_reduction <add>, %80, %cst_19 [1] : vector<2x32xf32> to vector<2xf32>
    %82 = vector.shape_cast %81 : vector<2xf32> to vector<2x1xf32>
    %83 = vector.broadcast %10 : vector<1x1xf32> to vector<2x1xf32>
    %84 = arith.addf %82, %83 : vector<2x1xf32>
    %cst_20 = arith.constant 0.000000e+00 : f32
    %85 = vector.broadcast %cst_20 : f32 to vector<2x1xf32>
    %86 = arith.maximumf %84, %85 : vector<2x1xf32>
    %cst_21 = arith.constant 0.000000e+00 : f32
    %87 = vector.broadcast %cst_21 : f32 to vector<2x96xf32>
    %cst_22 = arith.constant 0.000000e+00 : f32
    %88 = vector.broadcast %cst_22 : f32 to vector<2x120xf32>
    %cst_23 = arith.constant 0.000000e+00 : f32
    %89 = vector.broadcast %cst_23 : f32 to vector<2x127xf32>
    %cst_24 = arith.constant 0.000000e+00 : f32
    %90 = vector.broadcast %cst_24 : f32 to vector<2x128xf32>
    %91 = tpu.concatenate %78, %87 in 1 : vector<2x32xf32>, vector<2x96xf32> -> vector<2x128xf32>
    %92 = tpu.concatenate %38, %88 in 1 : vector<2x8xf32>, vector<2x120xf32> -> vector<2x128xf32>
    %93 = tpu.concatenate %86, %89 in 1 : vector<2x1xf32>, vector<2x127xf32> -> vector<2x128xf32>
    %94 = tpu.concatenate %91, %92, %93, %90 in 0 : vector<2x128xf32>, vector<2x128xf32>, vector<2x128xf32>, vector<2x128xf32> -> vector<8x128xf32>
    %c0_25 = arith.constant 0 : index
    %c0_26 = arith.constant 0 : index
    %95 = vector.load %arg5[%c0_25, %c0_26] : memref<8x128xf32, #tpu.memory_space<vmem>>, vector<8x128xf32>
    tpu.vector_store %arg5[%c0_25, %c0_26], %94 {strides = array<i32>} : memref<8x128xf32, #tpu.memory_space<vmem>>, vector<8x128xf32>,
    return
  }
}

</mosaic_0001>

<llo_original>
// kernel: decoder_forward.1
$region0: #{decoder_forward.1}
  #allocation0 [shape = 'u32[]', space=smem, size = 0x4, offset = 0x4, fixed_abs, tag = 'smem constant byte address 0x4 - core index']
  #allocation1 [shape = 'u32[144,128]{1,0:T(1,128)}', space=vmem, size = 0x12000, scoped, tag = 'internal scratch']
  %s0 = inlined_call_operand.vmem [shape: f32[2,1], index: 0, kind: input, shape index: {}]
  %s1 = inlined_call_operand.vmem [shape: f32[2,32], index: 1, kind: input, shape index: {}]
  %s2 = inlined_call_operand.hbm [shape: f32[2,8,32], index: 2, kind: input, shape index: {}]
  %s3 = inlined_call_operand.hbm [shape: bf16[96,128], index: 3, kind: input, shape index: {}]
  %s4 = inlined_call_operand.hbm [shape: f32[8,128], index: 4, kind: input, shape index: {}]
  %s5 = inlined_call_operand.vmem [shape: f32[8,128], index: 5, kind: output, shape index: {}]
  %s6 = sld [smem:[#allocation0]]
  $region42: #{decoder_forward.1} parent=0
    _
  %s8 = ssub.s32 1, %s6
  %s9 = scalar_select 0, %s8, %s6
  $region1: #{decoder_forward.1} parent=0
    #allocation2 [shape = 'u8[8192]{0}', space=vmem, size = 0x2000, scoped, tag = 'input window, operand 2, single buffered']
    #allocation3 [shape = 's32[1]{0}', space=sflag, size = 0x4, scoped, tag = 'scoped memory for decoder_forward.1']
    #allocation4 [shape = 'u8[24576]{0}', space=vmem, size = 0x6000, scoped, tag = 'input window, operand 3, single buffered']
    #allocation5 [shape = 's32[1]{0}', space=sflag, size = 0x4, scoped, tag = 'scoped memory for decoder_forward.1']
    #allocation6 [shape = 'u8[4096]{0}', space=vmem, size = 0x1000, scoped, tag = 'input window, operand 4, single buffered']
    %10 = vsyncpa [#allocation3], 0
    %11 = vsyncpa [#allocation5], 0
    // Predicated region
    $region2: #{decoder_forward.1} parent=1 // pred_check
      _
    $region3: #{decoder_forward.1} parent=1 // pred_check_branch
      %13 = sbr.rel (0) target = $region5
    $region4: #{decoder_forward.1} parent=1 // pred_region
      _
    $region5: #{decoder_forward.1} parent=1 // pred_fallthru
      _
    // Predicated region
    $region6: #{decoder_forward.1} parent=1 // pred_check
      _
    $region7: #{decoder_forward.1} parent=1 // pred_check_branch
      %15 = sbr.rel (0) target = $region9
    $region8: #{decoder_forward.1} parent=1 // pred_region
      _
    $region9: #{decoder_forward.1} parent=1 // pred_fallthru
      _
    // Predicated region
    $region10: #{decoder_forward.1} parent=1 // pred_check
      _
    $region11: #{decoder_forward.1} parent=1 // pred_check_branch
      %17 = sbr.rel (0) target = $region13
    $region12: #{decoder_forward.1} parent=1 // pred_region
      %s19 = ssub.s32 256, 256
      %20 = vsyncadd [#allocation3], %s19
      %s21 = sshll.u32 [#allocation2], 4
      %s22 = int_to_ptr.vmem [resolvable:$true] %s21
      %27 = dma.hbm_to_vmem [thread:$0]  %s2, 256, %s22, [#allocation3], 128, 128, 8
    $region13: #{decoder_forward.1} parent=1 // pred_fallthru
      _
    // Predicated region
    $region14: #{decoder_forward.1} parent=1 // pred_check
      _
    $region15: #{decoder_forward.1} parent=1 // pred_check_branch
      %29 = sbr.rel (0) target = $region17
    $region16: #{decoder_forward.1} parent=1 // pred_region
      %s31 = ssub.s32 768, 768
      %32 = vsyncadd [#allocation5], %s31
      %s33 = sshll.u32 [#allocation4], 4
      %s34 = int_to_ptr.vmem [resolvable:$true] %s33
      %39 = dma.hbm_to_vmem [thread:$0]  %s3, 768, %s34, [#allocation5], 64, 64, 4
    $region17: #{decoder_forward.1} parent=1 // pred_fallthru
      _
    // Predicated region
    $region18: #{decoder_forward.1} parent=1 // pred_check
      _
    $region19: #{decoder_forward.1} parent=1 // pred_check_branch
      %41 = sbr.rel (0) target = $region21
    $region20: #{decoder_forward.1} parent=1 // pred_region
      %s43 = ssub.s32 128, 128
      %44 = vsyncadd [#allocation5], %s43
      %s46 = sshll.u32 [#allocation6], 4
      %s47 = int_to_ptr.vmem [resolvable:$true] %s46
      %49 = dma.hbm_to_vmem [thread:$0]  %s4, 128, %s47, [#allocation5]
    $region21: #{decoder_forward.1} parent=1 // pred_fallthru
      _
    // Predicated region
    $region22: #{decoder_forward.1} parent=1 // pred_check
      _
    $region23: #{decoder_forward.1} parent=1 // pred_check_branch
      %51 = sbr.rel (0) target = $region25
    $region24: #{decoder_forward.1} parent=1 // pred_region
      %52 = dma.done [#allocation3], 256
    $region25: #{decoder_forward.1} parent=1 // pred_fallthru
      _
    // Predicated region
    $region26: #{decoder_forward.1} parent=1 // pred_check
      _
    $region27: #{decoder_forward.1} parent=1 // pred_check_branch
      %54 = sbr.rel (0) target = $region29
    $region28: #{decoder_forward.1} parent=1 // pred_region
      %55 = dma.done [#allocation5], 768
    $region29: #{decoder_forward.1} parent=1 // pred_fallthru
      _
    // Predicated region
    $region30: #{decoder_forward.1} parent=1 // pred_check
      _
    $region31: #{decoder_forward.1} parent=1 // pred_check_branch
      %57 = sbr.rel (0) target = $region33
    $region32: #{decoder_forward.1} parent=1 // pred_region
      %58 = dma.done [#allocation5], 128
    $region33: #{decoder_forward.1} parent=1 // pred_fallthru
      _
    %v60 = vld [vmem:[#allocation4] sm:$0xf]
    %v61 = vld [vmem:[#allocation4 + $0x4] sm:$0xf]
    %v62 = vld [vmem:[#allocation4 + $0x8] sm:$0xf]
    %v63 = vld [vmem:[#allocation4 + $0xc] sm:$0xf]
    %v64 = vld [vmem:[#allocation4 + $0x10] sm:$0xf]
    %v65 = vld [vmem:[#allocation4 + $0x14] sm:$0xf]
    %v66 = vld [vmem:[#allocation4 + $0x18] sm:$0xf]
    %v67 = vld [vmem:[#allocation4 + $0x1c] sm:$0xf]
    %v68 = vld [vmem:[#allocation4 + $0x20] sm:$0xf]
    %v69 = vld [vmem:[#allocation4 + $0x24] sm:$0xf]
    %v70 = vld [vmem:[#allocation4 + $0x28] sm:$0xf]
    %v71 = vld [vmem:[#allocation4 + $0x2c] sm:$0xf]
    %v72 = vld [vmem:[#allocation6] sm:$0xff]
    %v73 = vld [vmem:[#allocation2] sm:$0xff]
    %v74 = vld [vmem:[#allocation2 + $0x8] sm:$0xff]
    %v75 = vpack.c.bf16 %v74, %v73
    %v80 = vunpack.c.l.b16 %v68
    %v81 = vunpack.c.l.b16 %v69
    %v82 = vunpack.c.l.b16 %v70
    %v83 = vunpack.c.l.b16 %v71
    %v84 = vpack.c.b16 %v81, %v80
    %v85 = vpack.c.b16 %v83, %v82
    %vm88 = vcmask 261120
    %v90 = vsel %vm88, %v75, 0
    %92 = vmatprep.subr.bf16.mxu0 0
    %93 = vmatpush1.bf16.msra.mxu0 %v84
    %94 = vmatprep.subr.bf16.mxu0 0
    %95 = vmatpush1.bf16.msra.mxu0 %v85
    %96 = vmatprep.subr.bf16.mxu0 0
    %97 = vmatpush1.bf16.msra.mxu0 0
    %98 = vmatprep.subr.bf16.mxu0 0
    %99 = vmatpush1.bf16.msra.mxu0 0
    %100 = vmatprep.subr.bf16.mxu0 0
    %101 = vmatpush1.bf16.msra.mxu0 0
    %102 = vmatprep.subr.bf16.mxu0 0
    %103 = vmatpush1.bf16.msra.mxu0 0
    %104 = vmatprep.subr.bf16.mxu0 0
    %105 = vmatpush1.bf16.msra.mxu0 0
    %106 = vmatprep.subr.bf16.mxu0 0
    %107 = vmatpush1.bf16.msra.mxu0 0
    %108 = vmatprep.subr.bf16.mxu0 0
    %109 = vmatpush1.bf16.msra.mxu0 0
    %110 = vmatprep.subr.bf16.mxu0 0
    %111 = vmatpush1.bf16.msra.mxu0 0
    %112 = vmatprep.subr.bf16.mxu0 0
    %113 = vmatpush1.bf16.msra.mxu0 0
    %114 = vmatprep.subr.bf16.mxu0 0
    %115 = vmatpush1.bf16.msra.mxu0 0
    %116 = vmatprep.subr.bf16.mxu0 0
    %117 = vmatpush1.bf16.msra.mxu0 0
    %118 = vmatprep.subr.bf16.mxu0 0
    %119 = vmatpush1.bf16.msra.mxu0 0
    %120 = vmatprep.subr.bf16.mxu0 0
    %121 = vmatpush1.bf16.msra.mxu0 0
    %122 = vmatprep.subr.bf16.mxu0 0
    %123 = vmatpush1.bf16.msra.mxu0 0
    %124 = vmatprep.mubr.bf16.mxu0 0
    %125 = vmatmul.mubr.bf16.gmra.mrb[0].mxu0 %v90
    %v126 = vpop.f32.mrb[0].mxu0
    %v127 = vadd.f32 0.0, %v126
    %v128 = vpop.f32.mrb[0].mxu0
    %v129 = vpop.f32.mrb[0].mxu0
    %v130 = vadd.f32 0.0, %v129
    %v131 = vpop.f32.mrb[0].mxu0
    %132 = vdwg.mxu0
    %v133 = vld [vmem:[%s0] sm:$0x3]
    %v134 = vld [vmem:[%s1] sm:$0x3]
    %v135 = vpack.c.bf16 %v134, %v134
    %v140 = vunpack.c.l.b16 %v60
    %v141 = vunpack.c.l.b16 %v61
    %v142 = vunpack.c.l.b16 %v62
    %v143 = vunpack.c.l.b16 %v63
    %v144 = vpack.c.b16 %v141, %v140
    %v145 = vpack.c.b16 %v143, %v142
    %v149 = vsel %vm88, %v135, 0
    %151 = vmatprep.subr.bf16.mxu0 0
    %152 = vmatpush1.bf16.msra.mxu0 %v144
    %153 = vmatprep.subr.bf16.mxu0 0
    %154 = vmatpush1.bf16.msra.mxu0 %v145
    %155 = vmatprep.subr.bf16.mxu0 0
    %156 = vmatpush1.bf16.msra.mxu0 0
    %157 = vmatprep.subr.bf16.mxu0 0
    %158 = vmatpush1.bf16.msra.mxu0 0
    %159 = vmatprep.subr.bf16.mxu0 0
    %160 = vmatpush1.bf16.msra.mxu0 0
    %161 = vmatprep.subr.bf16.mxu0 0
    %162 = vmatpush1.bf16.msra.mxu0 0
    %163 = vmatprep.subr.bf16.mxu0 0
    %164 = vmatpush1.bf16.msra.mxu0 0
    %165 = vmatprep.subr.bf16.mxu0 0
    %166 = vmatpush1.bf16.msra.mxu0 0
    %167 = vmatprep.subr.bf16.mxu0 0
    %168 = vmatpush1.bf16.msra.mxu0 0
    %169 = vmatprep.subr.bf16.mxu0 0
    %170 = vmatpush1.bf16.msra.mxu0 0
    %171 = vmatprep.subr.bf16.mxu0 0
    %172 = vmatpush1.bf16.msra.mxu0 0
    %173 = vmatprep.subr.bf16.mxu0 0
    %174 = vmatpush1.bf16.msra.mxu0 0
    %175 = vmatprep.subr.bf16.mxu0 0
    %176 = vmatpush1.bf16.msra.mxu0 0
    %177 = vmatprep.subr.bf16.mxu0 0
    %178 = vmatpush1.bf16.msra.mxu0 0
    %179 = vmatprep.subr.bf16.mxu0 0
    %180 = vmatpush1.bf16.msra.mxu0 0
    %181 = vmatprep.subr.bf16.mxu0 0
    %182 = vmatpush1.bf16.msra.mxu0 0
    %183 = vmatprep.mubr.bf16.mxu0 0
    %184 = vmatmul.mubr.bf16.gmra.mrb[0].mxu0 %v149
    %v185 = vpop.f32.mrb[0].mxu0
    %v186 = vadd.f32 0.0, %v185
    %v187 = vpop.f32.mrb[0].mxu0
    %v188 = vpop.f32.mrb[0].mxu0
    %v189 = vpop.f32.mrb[0].mxu0
    %190 = vdwg.mxu0
    %v193 = vunpack.c.l.s4 1966171168
    %v194 = vunpack.c.0.s8 %v193
    %v195 = vlaneseq
    %v196 = vshrl.u32 %v195, 7
    %v197 = vsub.s32 %v194, %v196
    %v198 = vrot.slane %v186, %v197
    %v199 = vcombine.high %v198, %v198
    %v201 = vunpack.c.l.s4 1966171168
    %v202 = vunpack.c.0.s8 %v201
    %v203 = vlaneseq
    %v204 = vshrl.u32 %v203, 7
    %v205 = vsub.s32 %v202, %v204
    %v206 = vrot.slane %v198, %v205
    %v208 = vunpack.c.l.s4 1966171168
    %v209 = vunpack.c.0.s8 %v208
    %v210 = vlaneseq
    %v211 = vshrl.u32 %v210, 7
    %v212 = vsub.s32 %v209, %v211
    %v213 = vrot.slane %v199, %v212
    %v214 = vlaneseq
    %v215 = vshrl.u32 %v214, 7
    %v216 = vsub.s32 0, %v215
    %v217 = vrot.slane %v206, %v216
    %v218 = vlaneseq
    %v219 = vshrl.u32 %v218, 7
    %v220 = vsub.s32 0, %v219
    %v221 = vrot.slane %v213, %v220
    %v224 = vadd.f32 %v217, %v127
    %v225 = vadd.f32 %v221, %v130
    %v226 = vtanh.pop %v224
    %v227 = vtanh.pop %v225
    %v228 = vlaneseq
    %v229 = vshrl.u32 %v228, 7
    %v230 = vsub.s32 0, %v229
    %v231 = vrot.slane %v72, %v230
    %v232 = vmul.f32 %v226, %v231
    %v233 = vmul.f32 %v227, %v231
    %v234 = vsel %vm88, %v232, 0.0
    %235 = vadd.xlane.f32.xlu0 %v234
    %v236 = vpop.xlane.xlu0 %235
    %v237 = vsel %vm88, %v233, 0.0
    %238 = vadd.xlane.f32.xlu0 %v237
    %v239 = vpop.xlane.xlu0 %238
    %v242 = vlaneseq
    %v243 = vand.u32 %v242, 127
    %v244 = vlaneseq
    %v245 = vshrl.u32 %v244, 7
    %v246 = vsub.s32 %v243, %v245
    %v247 = vrot.slane %v236, %v246
    %v248 = vlaneseq
    %v249 = vshrl.u32 %v248, 7
    %v250 = vsub.s32 %v243, %v249
    %v251 = vrot.slane %v239, %v250
    %vm252 = vcmask 1041409
    %v253 = vsel %vm252, %v251, %v247
    %vm255 = vcmask 58368
    %v256 = vsel %vm255, %v253, -inf
    %257 = vmax.xlane.f32.xlu0 %v256
    %v258 = vpop.xlane.xlu0 %257
    %v260 = vlaneseq
    %v261 = vshrl.u32 %v260, 7
    %v262 = vsub.s32 0, %v261
    %v263 = vrot.slane %v258, %v262
    %v264 = vlaneseq
    %v265 = vshrl.u32 %v264, 7
    %v266 = vsub.s32 1, %v265
    %v267 = vrot.slane %v258, %v266
    %v270 = vsub.f32 %v236, %v263
    %v271 = vsub.f32 %v239, %v267
    %v272 = vmul.f32 %v270, 1.442695
    %v273 = vpow.pop %v272
    %v274 = vmul.f32 %v271, 1.442695
    %v275 = vpow.pop %v274
    %278 = vset.pattern.permute.xlu0 0
    %279 = vperm.xlu0 %278, %v273
    %v280 = vpop.permute.xlu0 %279
    %281 = vset.pattern.permute.xlu0 0
    %282 = vperm.xlu0 %281, %v275
    %v283 = vpop.permute.xlu0 %282
    %v284 = vlaneseq
    %v285 = vshrl.u32 %v284, 7
    %v286 = vsub.s32 %v243, %v285
    %v287 = vrot.slane %v280, %v286
    %v288 = vlaneseq
    %v289 = vshrl.u32 %v288, 7
    %v290 = vsub.s32 %v243, %v289
    %v291 = vrot.slane %v283, %v290
    %v292 = vsel %vm252, %v291, %v287
    %v294 = vsel %vm255, %v292, 0.0
    %295 = vadd.xlane.f32.xlu0 %v294
    %v296 = vpop.xlane.xlu0 %295
    %v297 = vrcp.pop %v296
    %v299 = vlaneseq
    %v300 = vshrl.u32 %v299, 7
    %v301 = vsub.s32 0, %v300
    %v302 = vrot.slane %v297, %v301
    %v303 = vlaneseq
    %v304 = vshrl.u32 %v303, 7
    %v305 = vsub.s32 1, %v304
    %v306 = vrot.slane %v297, %v305
    %v309 = vmul.f32 %v273, %v302
    %v310 = vmul.f32 %v275, %v306
    %312 = vset.pattern.permute.xlu0 0
    %313 = vperm.xlu0 %312, %v309
    %v314 = vpop.permute.xlu0 %313
    %317 = vset.pattern.permute.xlu0 0
    %318 = vperm.xlu0 %317, %v310
    %v319 = vpop.permute.xlu0 %318
    %v321 = vmul.f32 %v314, %v73
    %v322 = vmul.f32 %v319, %v74
    %v323 = vsel %vm88, %v321, 0.0
    %v324 = vrot.slane %v323, 4
    %v325 = vadd.f32 %v323, %v324
    %v326 = vrot.slane %v325, 2
    %v327 = vadd.f32 %v325, %v326
    %v328 = vrot.slane %v327, 1
    %v329 = vadd.f32 %v327, %v328
    %v330 = vsel %vm88, %v322, 0.0
    %v331 = vrot.slane %v330, 4
    %v332 = vadd.f32 %v330, %v331
    %v333 = vrot.slane %v332, 2
    %v334 = vadd.f32 %v332, %v333
    %v335 = vrot.slane %v334, 1
    %v336 = vadd.f32 %v334, %v335
    %v337 = vpack.c.bf16 %v329, %v329
    %v338 = vpack.c.bf16 %v336, %v336
    %340 = vset.pattern.permute.xlu0 0
    %341 = vperm.xlu0 %340, %v133
    %v342 = vpop.permute.xlu0 %341
    %v344 = vlaneseq
    %v345 = vshrl.u32 %v344, 7
    %v346 = vsub.s32 2, %v345
    %v347 = vrot.slane %v72, %v346
    %v348 = vmul.f32 %v342, %v347
    %v351 = vunpack.c.l.b16 %v337
    %v352 = vunpack.c.l.b16 %v338
    %v353 = vsel %vm252, %v352, %v351
    %v354 = vpack.c.b16 %v353, %v353
    %v359 = vunpack.c.l.b16 %v64
    %v360 = vunpack.c.l.b16 %v65
    %v361 = vunpack.c.l.b16 %v66
    %v362 = vunpack.c.l.b16 %v67
    %v363 = vpack.c.b16 %v360, %v359
    %v364 = vpack.c.b16 %v362, %v361
    %v368 = vsel %vm88, %v354, 0
    %370 = vmatprep.subr.bf16.mxu0 0
    %371 = vmatpush1.bf16.msra.mxu0 %v363
    %372 = vmatprep.subr.bf16.mxu0 0
    %373 = vmatpush1.bf16.msra.mxu0 %v364
    %374 = vmatprep.subr.bf16.mxu0 0
    %375 = vmatpush1.bf16.msra.mxu0 0
    %376 = vmatprep.subr.bf16.mxu0 0
    %377 = vmatpush1.bf16.msra.mxu0 0
    %378 = vmatprep.subr.bf16.mxu0 0
    %379 = vmatpush1.bf16.msra.mxu0 0
    %380 = vmatprep.subr.bf16.mxu0 0
    %381 = vmatpush1.bf16.msra.mxu0 0
    %382 = vmatprep.subr.bf16.mxu0 0
    %383 = vmatpush1.bf16.msra.mxu0 0
    %384 = vmatprep.subr.bf16.mxu0 0
    %385 = vmatpush1.bf16.msra.mxu0 0
    %386 = vmatprep.subr.bf16.mxu0 0
    %387 = vmatpush1.bf16.msra.mxu0 0
    %388 = vmatprep.subr.bf16.mxu0 0
    %389 = vmatpush1.bf16.msra.mxu0 0
    %390 = vmatprep.subr.bf16.mxu0 0
    %391 = vmatpush1.bf16.msra.mxu0 0
    %392 = vmatprep.subr.bf16.mxu0 0
    %393 = vmatpush1.bf16.msra.mxu0 0
    %394 = vmatprep.subr.bf16.mxu0 0
    %395 = vmatpush1.bf16.msra.mxu0 0
    %396 = vmatprep.subr.bf16.mxu0 0
    %397 = vmatpush1.bf16.msra.mxu0 0
    %398 = vmatprep.subr.bf16.mxu0 0
    %399 = vmatpush1.bf16.msra.mxu0 0
    %400 = vmatprep.subr.bf16.mxu0 0
    %401 = vmatpush1.bf16.msra.mxu0 0
    %402 = vmatprep.mubr.bf16.mxu0 0
    %403 = vmatmul.mubr.bf16.gmra.mrb[0].mxu0 %v368
    %v404 = vpop.f32.mrb[0].mxu0
    %v405 = vadd.f32 %v348, %v404
    %v406 = vpop.f32.mrb[0].mxu0
    %v407 = vpop.f32.mrb[0].mxu0
    %v408 = vpop.f32.mrb[0].mxu0
    %409 = vdwg.mxu0
    %v410 = vlaneseq
    %v411 = vshrl.u32 %v410, 7
    %v412 = vsub.s32 3, %v411
    %v413 = vrot.slane %v72, %v412
    %v414 = vadd.f32 %v405, %v413
    %415 = vrot.lane.b32.xlu0 %v186, 96
    %v416 = vpop.permute.xlu0 %415
    %v418 = vadd.f32 %v414, %v416
    %v419 = vxor.u32 %v418, 2147483648
    %v420 = vmul.f32 %v419, 1.442695
    %v421 = vpow.pop %v420
    %v422 = vadd.f32 %v421, 1.0
    %v423 = vrcp.pop %v422
    %v424 = vmul.f32 1.0, %v423
    %v425 = vlaneseq
    %v426 = vshrl.u32 %v425, 7
    %v427 = vsub.s32 4, %v426
    %v428 = vrot.slane %v72, %v427
    %430 = vrot.lane.b32.xlu0 %v428, 96
    %v431 = vpop.permute.xlu0 %430
    %v433 = vadd.f32 %v186, %v431
    %435 = vrot.lane.b32.xlu0 %v433, 32
    %v436 = vpop.permute.xlu0 %435
    %v438 = vmul.f32 %v424, %v436
    %440 = vrot.lane.b32.xlu0 %v438, 64
    %v441 = vpop.permute.xlu0 %440
    %v443 = vadd.f32 %v414, %v441
    %v444 = vtanh.pop %v443
    %v445 = vsub.f32 1.0, %v424
    %447 = vrot.lane.b32.xlu0 %v444, 96
    %v448 = vpop.permute.xlu0 %447
    %v450 = vmul.f32 %v445, %v448
    %452 = vrot.lane.b32.xlu0 %v134, 32
    %v453 = vpop.permute.xlu0 %452
    %v455 = vmul.f32 %v424, %v453
    %v456 = vadd.f32 %v450, %v455
    %v457 = vlaneseq
    %v458 = vshrl.u32 %v457, 7
    %v459 = vsub.s32 1, %v458
    %v460 = vrot.slane %v72, %v459
    %462 = vrot.lane.b32.xlu0 %v460, 32
    %v463 = vpop.permute.xlu0 %462
    %v465 = vmul.f32 %v456, %v463
    %467 = vrot.lane.b32.xlu0 %v465, 96
    %v468 = vpop.permute.xlu0 %467
    %vm470 = vcmask 254976
    %v471 = vsel %vm470, %v468, 0.0
    %472 = vadd.xlane.f32.xlu0 %v471
    %v473 = vpop.xlane.xlu0 %472
    %v474 = vlaneseq
    %v475 = vshrl.u32 %v474, 7
    %v476 = vsub.s32 5, %v475
    %v477 = vrot.slane %v72, %v476
    %v478 = vadd.f32 %v473, %v477
    %v479 = vmax.f32 %v478, 0.0
    %481 = vrot.lane.b32.xlu0 %v456, 96
    %v482 = vpop.permute.xlu0 %481
    %v484 = vsel %vm88, %v482, 0.0
    %v485 = vlaneseq
    %v486 = vshrl.u32 %v485, 7
    %v487 = vsub.s32 %v243, %v486
    %v488 = vrot.slane %v314, %v487
    %v489 = vlaneseq
    %v490 = vshrl.u32 %v489, 7
    %v491 = vsub.s32 %v243, %v490
    %v492 = vrot.slane %v319, %v491
    %v493 = vsel %vm252, %v492, %v488
    %vm495 = vcmask 64512
    %v496 = vsel %vm495, %v493, 0.0
    %vm497 = vcmask 7168
    %v498 = vsel %vm497, %v479, 0.0
    %v500 = vrot.slane %v496, 6
    %v503 = vrot.slane %v498, 4
    %vm505 = vcmask 1041408
    %v506 = vsel %vm505, %v484, %v500
    %vm507 = vcmask 1043456
    %v508 = vsel %vm507, %v506, %v503
    %vm509 = vcmask 1045504
    %v510 = vsel %vm509, %v508, 0.0
    %511 = vst [vmem:[%s5] sm:$0xff] %v510
    // Predicated region
    $region34: #{decoder_forward.1} parent=1 // pred_check
      _
    $region35: #{decoder_forward.1} parent=1 // pred_check_branch
      %513 = sbr.rel (0) target = $region37
    $region36: #{decoder_forward.1} parent=1 // pred_region
      _
    $region37: #{decoder_forward.1} parent=1 // pred_fallthru
      _
    // Predicated region
    $region38: #{decoder_forward.1} parent=1 // pred_check
      _
    $region39: #{decoder_forward.1} parent=1 // pred_check_branch
      %515 = sbr.rel (0) target = $region41
    $region40: #{decoder_forward.1} parent=1 // pred_region
      _
    $region41: #{decoder_forward.1} parent=1 // pred_fallthru
      _
    %516 = vsyncpa [#allocation3], 1
    %517 = vsyncpa [#allocation5], 1

</llo_original>
